<compile_context>
chip_gen: v6e
topology: v6e:2x2x1
jax: 0.10.0
libtpu: 0.0.40
codegen_flags: <defaults>
</compile_context>

<pallas_src>
import functools

import jax
import jax.numpy as jnp
from jax.experimental import pallas as pl
from jax.experimental.pallas import tpu as pltpu

HIDDEN = 64
LANE = 128  # w3 / bias lane padding (zero lanes are masked out of the argmax)


def _round_up(n, m):
    return ((n + m - 1) // m) * m


def _batch_tile(B, block_b):
    """Batch tile: multiple of 16; >=2 grid steps when possible (v7x megacore)."""
    tb = min(block_b, _round_up(B, 16))
    if B > 16:
        tb = min(tb, _round_up(pl.cdiv(B, 2), 16))
    return max(tb, 16)


def _mlp_q(x_ref, w1_ref, w2_ref, w3_ref, b_ref):
    """Shared 3-layer MLP body. bf16 MXU operands, f32 accumulation / elementwise."""
    x = x_ref[...].astype(jnp.bfloat16)               # in-kernel cast (VPU slack)
    b = b_ref[...]                                    # (3, LANE) f32 packed biases

    # fc1 + relu
    h1 = jnp.dot(x, w1_ref[...], preferred_element_type=jnp.float32)
    h1 = jnp.maximum(h1 + b[0:1, :HIDDEN], 0.0)

    # fc2 + relu
    h2 = jnp.dot(h1.astype(jnp.bfloat16), w2_ref[...],
                 preferred_element_type=jnp.float32)
    h2 = jnp.maximum(h2 + b[1:2, :HIDDEN], 0.0)

    # fc3 (no activation); w3/b3 zero-padded to LANE lanes in VMEM
    q = jnp.dot(h2.astype(jnp.bfloat16), w3_ref[...],
                preferred_element_type=jnp.float32) + b[2:3, :]
    return q                                          # (tb, LANE) f32


def _greedy(q, action_size):
    """Greedy action (min-index tie-break == jnp.argmax) + max-Q over real lanes."""
    lane = jax.lax.broadcasted_iota(jnp.int32, q.shape, dimension=1)
    valid = lane < action_size
    q_valid = jnp.where(valid, q, -jnp.inf)
    q_max = jnp.max(q_valid, axis=-1, keepdims=True)
    idx = jnp.where((q_valid == q_max) & valid, lane, jnp.int32(LANE))
    return jnp.min(idx, axis=-1, keepdims=True), q_max


def dqn_q_kernel(x_ref, w1_ref, w2_ref, w3_ref, b_ref, q_ref, a_ref, *, action_size):
    q = _mlp_q(x_ref, w1_ref, w2_ref, w3_ref, b_ref)
    # Narrow f32 Q store: only the real action lanes go back to HBM.
    q_ref[...] = q[:, :action_size]
    a, _ = _greedy(q, action_size)
    a_ref[...] = a


def dqn_act_kernel(x_ref, w1_ref, w2_ref, w3_ref, b_ref, a_ref, qmax_ref, *, action_size):
    q = _mlp_q(x_ref, w1_ref, w2_ref, w3_ref, b_ref)
    a, qmax = _greedy(q, action_size)
    a_ref[...] = a
    qmax_ref[...] = qmax


def _weight_specs(S, out_pad):
    """Constant-index BlockSpecs: weights + packed bias stay VMEM-resident."""
    return [
        pl.BlockSpec((S, HIDDEN), lambda i: (0, 0)),        # w1
        pl.BlockSpec((HIDDEN, HIDDEN), lambda i: (0, 0)),   # w2
        pl.BlockSpec((HIDDEN, out_pad), lambda i: (0, 0)),  # w3 (lane-padded)
        pl.BlockSpec((3, out_pad), lambda i: (0, 0)),       # packed biases
    ]


@functools.partial(jax.jit, static_argnames=("action_size", "block_b"))
def dqn_forward(x, w1, w2, w3p, bias, *, action_size, block_b=2048):
    """Full forward: Q values (B, action_size) f32 + fused greedy actions (B,)."""
    B, S = x.shape
    out_pad = w3p.shape[1]
    tb = _batch_tile(B, block_b)
    grid = (pl.cdiv(B, tb),)

    kernel = functools.partial(dqn_q_kernel, action_size=action_size)
    q, actions = pl.pallas_call(
        kernel,
        grid=grid,
        in_specs=[pl.BlockSpec((tb, S), lambda i: (i, 0))] + _weight_specs(S, out_pad),
        out_specs=[
            pl.BlockSpec((tb, action_size), lambda i: (i, 0)),  # narrow Q
            pl.BlockSpec((tb, 1), lambda i: (i, 0)),            # greedy actions
        ],
        out_shape=[
            jax.ShapeDtypeStruct((B, action_size), jnp.float32),
            jax.ShapeDtypeStruct((B, 1), jnp.int32),
        ],
        compiler_params=pltpu.CompilerParams(
            dimension_semantics=("parallel",),  # v7x: shard batch tiles across TCs
        ),
    )(x, w1, w2, w3p, bias)

    return q, actions[:, 0]


@functools.partial(jax.jit, static_argnames=("action_size", "block_b"))
def dqn_act(x, w1, w2, w3p, bias, *, action_size, block_b=2048):
    """Act / target path: greedy actions + max-Q only (no full-Q HBM writeback)."""
    B, S = x.shape
    out_pad = w3p.shape[1]
    tb = _batch_tile(B, block_b)
    grid = (pl.cdiv(B, tb),)

    kernel = functools.partial(dqn_act_kernel, action_size=action_size)
    actions, qmax = pl.pallas_call(
        kernel,
        grid=grid,
        in_specs=[pl.BlockSpec((tb, S), lambda i: (i, 0))] + _weight_specs(S, out_pad),
        out_specs=[
            pl.BlockSpec((tb, 1), lambda i: (i, 0)),
            pl.BlockSpec((tb, 1), lambda i: (i, 0)),
        ],
        out_shape=[
            jax.ShapeDtypeStruct((B, 1), jnp.int32),
            jax.ShapeDtypeStruct((B, 1), jnp.float32),
        ],
        compiler_params=pltpu.CompilerParams(
            dimension_semantics=("parallel",),
        ),
    )(x, w1, w2, w3p, bias)

    return actions[:, 0], qmax[:, 0]


def prepare_params(params, action_size):
    """Pack f32 (in, out)-layout params into bf16 weights + one padded f32 bias block."""
    w1, b1, w2, b2, w3, b3 = params
    w3p = jnp.zeros((HIDDEN, LANE), jnp.float32).at[:, :action_size].set(w3)
    bias = jnp.zeros((3, LANE), jnp.float32)
    bias = bias.at[0, :HIDDEN].set(b1.reshape(-1))
    bias = bias.at[1, :HIDDEN].set(b2.reshape(-1))
    bias = bias.at[2, :action_size].set(b3.reshape(-1))
    return (w1.astype(jnp.bfloat16), w2.astype(jnp.bfloat16),
            w3p.astype(jnp.bfloat16), bias)


def init_dqn_params(key, state_size, action_size, hidden=HIDDEN):
    """Deterministic init mirroring PyTorch nn.Linear default
    (uniform in [-1/sqrt(fan_in), 1/sqrt(fan_in)]); weights stored as (in, out)."""
    def linear(key, fan_in, fan_out):
        kw, kb = jax.random.split(key)
        bound = 1.0 / jnp.sqrt(jnp.float32(fan_in))
        w = jax.random.uniform(kw, (fan_in, fan_out), jnp.float32, -bound, bound)
        b = jax.random.uniform(kb, (1, fan_out), jnp.float32, -bound, bound)
        return w, b

    k1, k2, k3 = jax.random.split(key, 3)
    w1, b1 = linear(k1, state_size, hidden)
    w2, b2 = linear(k2, hidden, hidden)
    w3, b3 = linear(k3, hidden, action_size)
    return (w1, b1, w2, b2, w3, b3)


def dqn_reference(x, params):
    """Pure-JAX reference matching the kernel's numerics: bf16 operands, f32 acc."""
    w1, b1, w2, b2, w3, b3 = params
    bf = lambda a: a.astype(jnp.bfloat16).astype(jnp.float32)
    h1 = jnp.maximum(bf(x) @ bf(w1) + b1, 0.0)
    h2 = jnp.maximum(bf(h1) @ bf(w2) + b2, 0.0)
    return bf(h2) @ bf(w3) + b3


if __name__ == "__main__":
    # Small, module-consistent shapes: a batch of flat observation vectors.
    batch = 2
    state_size = 8      # env.observation_space.shape[0]
    action_size = 4     # env.action_space.n

    key = jax.random.PRNGKey(0)
    kx, kp, kx2 = jax.random.split(key, 3)
    x = jax.random.normal(kx, (batch, state_size), dtype=jnp.float32)
    params = init_dqn_params(kp, state_size, action_size)
    w1b, w2b, w3b, bias = prepare_params(params, action_size)

    # Full forward (Q + fused greedy actions).
    q, actions = dqn_forward(x, w1b, w2b, w3b, bias, action_size=action_size)
    q = jax.block_until_ready(q)
    actions = jax.block_until_ready(actions)

    ref = dqn_reference(x, params)
    assert q.shape == (batch, action_size)
    assert actions.shape == (batch,)
    assert jnp.allclose(q, ref, atol=1e-3, rtol=1e-3)
    assert jnp.array_equal(actions, jnp.argmax(q, axis=-1))

    # Act-only path: actions + max-Q without the full Q writeback.
    a_act, qmax = dqn_act(x, w1b, w2b, w3b, bias, action_size=action_size)
    a_act = jax.block_until_ready(a_act)
    qmax = jax.block_until_ready(qmax)
    assert jnp.array_equal(a_act, actions)
    assert jnp.allclose(qmax, jnp.max(q, axis=-1), atol=1e-6)

    # Multi-tile batch with a partial last tile to exercise the pipelined grid
    # path (B=300, block_b=128 -> tb=128, grid of 3 steps, last tile 44 rows).
    xb = jax.random.normal(kx2, (300, state_size), dtype=jnp.float32)
    qb, ab = dqn_forward(xb, w1b, w2b, w3b, bias,
                         action_size=action_size, block_b=128)
    qb = jax.block_until_ready(qb)
    ab = jax.block_until_ready(ab)
    refb = dqn_reference(xb, params)
    assert qb.shape == (300, action_size)
    assert jnp.allclose(qb, refb, atol=1e-3, rtol=1e-3)
    assert jnp.array_equal(ab, jnp.argmax(qb, axis=-1))

    ab2, qmax2 = dqn_act(xb, w1b, w2b, w3b, bias,
                         action_size=action_size, block_b=128)
    ab2 = jax.block_until_ready(ab2)
    qmax2 = jax.block_until_ready(qmax2)
    assert jnp.array_equal(ab2, ab)
    assert jnp.allclose(qmax2, jnp.max(qb, axis=-1), atol=1e-6)

    print("KERNEL_OK")
</pallas_src>

<mosaic_0001>
module attributes {stable_mosaic.version = 11 : i64} {
  func.func @dqn_q_kernel(%arg0: i32, %arg1: memref<16x8xf32, #tpu.memory_space<vmem>>, %arg2: memref<8x64xbf16, #tpu.memory_space<vmem>>, %arg3: memref<64x64xbf16, #tpu.memory_space<vmem>>, %arg4: memref<64x128xbf16, #tpu.memory_space<vmem>>, %arg5: memref<3x128xf32, #tpu.memory_space<vmem>>, %arg6: memref<16x4xf32, #tpu.memory_space<vmem>>, %arg7: memref<16x1xi32, #tpu.memory_space<vmem>>) attributes {dimension_semantics = [#tpu.dimension_semantics<parallel>], iteration_bounds = array<i64: 1>, scalar_prefetch = 0 : i64, scratch_operands = 0 : i64, tpu.core_type = #tpu.core_type<tc>, window_params = [{transform_indices = @transform_0, window_bounds = array<i64: 16, 8>}, {pipeline_mode = #tpu.pipeline_mode<synchronous>, transform_indices = @transform_1, window_bounds = array<i64: 8, 64>}, {pipeline_mode = #tpu.pipeline_mode<synchronous>, transform_indices = @transform_2, window_bounds = array<i64: 64, 64>}, {pipeline_mode = #tpu.pipeline_mode<synchronous>, transform_indices = @transform_3, window_bounds = array<i64: 64, 128>}, {pipeline_mode = #tpu.pipeline_mode<synchronous>, transform_indices = @transform_4, window_bounds = array<i64: 3, 128>}, {transform_indices = @transform_5, window_bounds = array<i64: 16, 4>}, {transform_indices = @transform_6, window_bounds = array<i64: 16, 1>}]} {
    %c0 = arith.constant 0 : index
    %c0_0 = arith.constant 0 : index
    %0 = vector.load %arg1[%c0, %c0_0] : memref<16x8xf32, #tpu.memory_space<vmem>>, vector<16x8xf32>
    %1 = arith.truncf %0 : vector<16x8xf32> to vector<16x8xbf16>
    %c0_1 = arith.constant 0 : index
    %c0_2 = arith.constant 0 : index
    %2 = vector.load %arg5[%c0_1, %c0_2] : memref<3x128xf32, #tpu.memory_space<vmem>>, vector<3x128xf32>
    %c0_3 = arith.constant 0 : index
    %c0_4 = arith.constant 0 : index
    %3 = vector.load %arg2[%c0_3, %c0_4] : memref<8x64xbf16, #tpu.memory_space<vmem>>, vector<8x64xbf16>
    %cst = arith.constant dense<0.000000e+00> : vector<16x64xf32>
    %4 = tpu.matmul %1, %3, %cst {dimension_numbers = #tpu.dot_dimension_numbers<[1], [0], [0], [1], [0, 0, 1, 1], [], []>} : vector<16x8xbf16>, vector<8x64xbf16>, vector<16x64xf32> -> vector<16x64xf32>
    %5 = vector.extract_strided_slice %2 {offsets = [0, 0], sizes = [1, 64], strides = [1, 1]} : vector<3x128xf32> to vector<1x64xf32>
    %6 = vector.broadcast %5 : vector<1x64xf32> to vector<16x64xf32>
    %7 = arith.addf %4, %6 : vector<16x64xf32>
    %cst_5 = arith.constant 0.000000e+00 : f32
    %8 = vector.broadcast %cst_5 : f32 to vector<16x64xf32>
    %9 = arith.maximumf %7, %8 : vector<16x64xf32>
    %10 = arith.truncf %9 : vector<16x64xf32> to vector<16x64xbf16>
    %c0_6 = arith.constant 0 : index
    %c0_7 = arith.constant 0 : index
    %11 = vector.load %arg3[%c0_6, %c0_7] : memref<64x64xbf16, #tpu.memory_space<vmem>>, vector<64x64xbf16>
    %cst_8 = arith.constant dense<0.000000e+00> : vector<16x64xf32>
    %12 = tpu.matmul %10, %11, %cst_8 {dimension_numbers = #tpu.dot_dimension_numbers<[1], [0], [0], [1], [0, 0, 1, 1], [], []>} : vector<16x64xbf16>, vector<64x64xbf16>, vector<16x64xf32> -> vector<16x64xf32>
    %13 = vector.extract_strided_slice %2 {offsets = [1, 0], sizes = [1, 64], strides = [1, 1]} : vector<3x128xf32> to vector<1x64xf32>
    %14 = vector.broadcast %13 : vector<1x64xf32> to vector<16x64xf32>
    %15 = arith.addf %12, %14 : vector<16x64xf32>
    %cst_9 = arith.constant 0.000000e+00 : f32
    %16 = vector.broadcast %cst_9 : f32 to vector<16x64xf32>
    %17 = arith.maximumf %15, %16 : vector<16x64xf32>
    %18 = arith.truncf %17 : vector<16x64xf32> to vector<16x64xbf16>
    %c0_10 = arith.constant 0 : index
    %c0_11 = arith.constant 0 : index
    %19 = vector.load %arg4[%c0_10, %c0_11] : memref<64x128xbf16, #tpu.memory_space<vmem>>, vector<64x128xbf16>
    %cst_12 = arith.constant dense<0.000000e+00> : vector<16x128xf32>
    %20 = tpu.matmul %18, %19, %cst_12 {dimension_numbers = #tpu.dot_dimension_numbers<[1], [0], [0], [1], [0, 0, 1, 1], [], []>} : vector<16x64xbf16>, vector<64x128xbf16>, vector<16x128xf32> -> vector<16x128xf32>
    %21 = vector.extract_strided_slice %2 {offsets = [2, 0], sizes = [1, 128], strides = [1, 1]} : vector<3x128xf32> to vector<1x128xf32>
    %22 = vector.broadcast %21 : vector<1x128xf32> to vector<16x128xf32>
    %23 = arith.addf %20, %22 : vector<16x128xf32>
    %24 = vector.extract_strided_slice %23 {offsets = [0, 0], sizes = [16, 4], strides = [1, 1]} : vector<16x128xf32> to vector<16x4xf32>
    %c0_13 = arith.constant 0 : index
    %c0_14 = arith.constant 0 : index
    %25 = vector.load %arg6[%c0_13, %c0_14] : memref<16x4xf32, #tpu.memory_space<vmem>>, vector<16x4xf32>
    tpu.vector_store %arg6[%c0_13, %c0_14], %24 {strides = array<i32>} : memref<16x4xf32, #tpu.memory_space<vmem>>, vector<16x4xf32>,
    %26 = tpu.iota {dimensions = array<i32: 1>} : vector<16x128xi32>
    %c4_i32 = arith.constant 4 : i32
    %27 = vector.broadcast %c4_i32 : i32 to vector<16x128xi32>
    %28 = arith.cmpi slt, %26, %27 : vector<16x128xi32>
    %cst_15 = arith.constant 0xFF800000 : f32
    %29 = vector.broadcast %cst_15 : f32 to vector<16x128xf32>
    %30 = arith.select %28, %23, %29 : vector<16x128xi1>, vector<16x128xf32>
    %cst_16 = arith.constant dense<0xFF800000> : vector<16xf32>
    %31 = vector.multi_reduction <maximumf>, %30, %cst_16 [1] : vector<16x128xf32> to vector<16xf32>
    %32 = vector.shape_cast %31 : vector<16xf32> to vector<16x1xf32>
    %33 = vector.broadcast %32 : vector<16x1xf32> to vector<16x128xf32>
    %34 = arith.cmpf oeq, %30, %33 : vector<16x128xf32>
    %35 = arith.andi %34, %28 : vector<16x128xi1>
    %c128_i32 = arith.constant 128 : i32
    %36 = vector.broadcast %c128_i32 : i32 to vector<16x128xi32>
    %37 = arith.select %35, %26, %36 : vector<16x128xi1>, vector<16x128xi32>
    %cst_17 = arith.constant dense<2147483647> : vector<16xi32>
    %38 = vector.multi_reduction <minsi>, %37, %cst_17 [1] : vector<16x128xi32> to vector<16xi32>
    %39 = vector.shape_cast %38 : vector<16xi32> to vector<16x1xi32>
    %c0_18 = arith.constant 0 : index
    %c0_19 = arith.constant 0 : index
    %40 = vector.load %arg7[%c0_18, %c0_19] : memref<16x1xi32, #tpu.memory_space<vmem>>, vector<16x1xi32>
    tpu.vector_store %arg7[%c0_18, %c0_19], %39 {strides = array<i32>} : memref<16x1xi32, #tpu.memory_space<vmem>>, vector<16x1xi32>,
    return
  }
  func.func @transform_0(%arg0: i32) -> (i32, i32) {
    %c0_i32 = arith.constant 0 : i32
    %c0_i32_0 = arith.constant 0 : i32
    return %arg0, %c0_i32 : i32, i32
  }
  func.func @transform_1(%arg0: i32) -> (i32, i32) {
    %c0_i32 = arith.constant 0 : i32
    %c0_i32_0 = arith.constant 0 : i32
    %c0_i32_1 = arith.constant 0 : i32
    return %c0_i32, %c0_i32_0 : i32, i32
  }
  func.func @transform_2(%arg0: i32) -> (i32, i32) {
    %c0_i32 = arith.constant 0 : i32
    %c0_i32_0 = arith.constant 0 : i32
    %c0_i32_1 = arith.constant 0 : i32
    return %c0_i32, %c0_i32_0 : i32, i32
  }
  func.func @transform_3(%arg0: i32) -> (i32, i32) {
    %c0_i32 = arith.constant 0 : i32
    %c0_i32_0 = arith.constant 0 : i32
    %c0_i32_1 = arith.constant 0 : i32
    return %c0_i32, %c0_i32_0 : i32, i32
  }
  func.func @transform_4(%arg0: i32) -> (i32, i32) {
    %c0_i32 = arith.constant 0 : i32
    %c0_i32_0 = arith.constant 0 : i32
    %c0_i32_1 = arith.constant 0 : i32
    return %c0_i32, %c0_i32_0 : i32, i32
  }
  func.func @transform_5(%arg0: i32) -> (i32, i32) {
    %c0_i32 = arith.constant 0 : i32
    %c0_i32_0 = arith.constant 0 : i32
    return %arg0, %c0_i32 : i32, i32
  }
  func.func @transform_6(%arg0: i32) -> (i32, i32) {
    %c0_i32 = arith.constant 0 : i32
    %c0_i32_0 = arith.constant 0 : i32
    return %arg0, %c0_i32 : i32, i32
  }
}

</mosaic_0001>

<llo_original>
// kernel: dqn_forward.1
$region0: #{dqn_forward.1}
  #allocation0 [shape = 'u32[]', space=smem, size = 0x4, offset = 0x4, fixed_abs, tag = 'smem constant byte address 0x4 - core index']
  #allocation1 [shape = 'u32[144,128]{1,0:T(1,128)}', space=vmem, size = 0x12000, scoped, tag = 'internal scratch']
  %s0 = inlined_call_operand.hbm [shape: f32[2,8], index: 0, kind: input, shape index: {}]
  %s1 = inlined_call_operand.hbm [shape: bf16[8,64], index: 1, kind: input, shape index: {}]
  %s2 = inlined_call_operand.hbm [shape: bf16[64,64], index: 2, kind: input, shape index: {}]
  %s3 = inlined_call_operand.hbm [shape: bf16[64,128], index: 3, kind: input, shape index: {}]
  %s4 = inlined_call_operand.vmem [shape: f32[3,128], index: 4, kind: input, shape index: {}]
  %s5 = inlined_call_operand.hbm [shape: f32[2,4], index: 5, kind: output, shape index: {0}]
  %s6 = inlined_call_operand.vmem [shape: s32[2,1], index: 6, kind: output, shape index: {1}]
  %7 = xla_tuple %s5, %s6
  %s8 = sld [smem:[#allocation0]]
  $region84: #{dqn_forward.1} parent=0
    _
  %s10 = ssub.s32 1, %s8
  %s11 = scalar_select 0, %s10, %s8
  $region1: #{dqn_forward.1} parent=0
    #allocation2 [shape = 'u8[8192]{0}', space=vmem, size = 0x2000, scoped, tag = 'input window, operand 0, single buffered']
    #allocation3 [shape = 's32[1]{0}', space=sflag, size = 0x4, scoped, tag = 'scoped memory for dqn_forward.1']
    #allocation4 [shape = 's32[1]{0}', space=sflag, size = 0x4, scoped, tag = 'scoped memory for dqn_forward.1']
    #allocation5 [shape = 'u8[2048]{0}', space=vmem, size = 0x800, scoped, tag = 'input window, operand 1, single buffered']
    #allocation6 [shape = 's32[1]{0}', space=sflag, size = 0x4, scoped, tag = 'scoped memory for dqn_forward.1']
    #allocation7 [shape = 'u8[16384]{0}', space=vmem, size = 0x4000, scoped, tag = 'input window, operand 2, single buffered']
    #allocation8 [shape = 'u8[16384]{0}', space=vmem, size = 0x4000, scoped, tag = 'input window, operand 3, single buffered']
    #allocation9 [shape = 's32[1]{0}', space=sflag, size = 0x4, scoped, tag = 'scoped memory for dqn_forward.1']
    #allocation10 [shape = 'u8[8192]{0}', space=vmem, size = 0x2000, scoped, tag = 'output window, operand 0, single buffered']
    #allocation11 [shape = 'u8[8192]{0}', space=vmem, size = 0x2000, scoped, tag = 'output window, operand 1, single buffered']
    %12 = vsyncpa [#allocation3], 0
    %13 = vsyncpa [#allocation6], 0
    %14 = vsyncpa [#allocation9], 0
    %15 = vsyncpa [#allocation4], 0
    // Predicated region
    $region2: #{dqn_forward.1} parent=1 // pred_check
      _
    $region3: #{dqn_forward.1} parent=1 // pred_check_branch
      %17 = sbr.rel (0) target = $region5
    $region4: #{dqn_forward.1} parent=1 // pred_region
      %s19 = ssub.s32 256, 32
      %20 = vsyncadd [#allocation3], %s19
      %s21 = sshll.u32 [#allocation2], 4
      %s22 = int_to_ptr.vmem [resolvable:$true] %s21
      %27 = dma.hbm_to_vmem [thread:$0]  %s0, 32, %s22, [#allocation3], 32, 32, 2
    $region5: #{dqn_forward.1} parent=1 // pred_fallthru
      _
    // Predicated region
    $region6: #{dqn_forward.1} parent=1 // pred_check
      _
    $region7: #{dqn_forward.1} parent=1 // pred_check_branch
      %29 = sbr.rel (0) target = $region9
    $region8: #{dqn_forward.1} parent=1 // pred_region
      %s31 = ssub.s32 64, 64
      %32 = vsyncadd [#allocation6], %s31
      %s34 = sshll.u32 [#allocation5], 4
      %s35 = int_to_ptr.vmem [resolvable:$true] %s34
      %37 = dma.hbm_to_vmem [thread:$0]  %s1, 64, %s35, [#allocation6]
    $region9: #{dqn_forward.1} parent=1 // pred_fallthru
      _
    // Predicated region
    $region10: #{dqn_forward.1} parent=1 // pred_check
      _
    $region11: #{dqn_forward.1} parent=1 // pred_check_branch
      %39 = sbr.rel (0) target = $region13
    $region12: #{dqn_forward.1} parent=1 // pred_region
      %s41 = ssub.s32 512, 512
      %42 = vsyncadd [#allocation6], %s41
      %s43 = sshll.u32 [#allocation7], 4
      %s44 = int_to_ptr.vmem [resolvable:$true] %s43
      %49 = dma.hbm_to_vmem [thread:$0]  %s2, 512, %s44, [#allocation6], 64, 64, 4
    $region13: #{dqn_forward.1} parent=1 // pred_fallthru
      _
    // Predicated region
    $region14: #{dqn_forward.1} parent=1 // pred_check
      _
    $region15: #{dqn_forward.1} parent=1 // pred_check_branch
      %51 = sbr.rel (0) target = $region17
    $region16: #{dqn_forward.1} parent=1 // pred_region
      %s53 = ssub.s32 512, 512
      %54 = vsyncadd [#allocation9], %s53
      %s55 = sshll.u32 [#allocation8], 4
      %s56 = int_to_ptr.vmem [resolvable:$true] %s55
      %61 = dma.hbm_to_vmem [thread:$0]  %s3, 512, %s56, [#allocation9], 64, 64, 4
    $region17: #{dqn_forward.1} parent=1 // pred_fallthru
      _
    // Predicated region
    $region18: #{dqn_forward.1} parent=1 // pred_check
      _
    $region19: #{dqn_forward.1} parent=1 // pred_check_branch
      %63 = sbr.rel (0) target = $region21
    $region20: #{dqn_forward.1} parent=1 // pred_region
      _
    $region21: #{dqn_forward.1} parent=1 // pred_fallthru
      _
    // Predicated region
    $region22: #{dqn_forward.1} parent=1 // pred_check
      _
    $region23: #{dqn_forward.1} parent=1 // pred_check_branch
      %65 = sbr.rel (0) target = $region25
    $region24: #{dqn_forward.1} parent=1 // pred_region
      %66 = dma.done [#allocation3], 256
    $region25: #{dqn_forward.1} parent=1 // pred_fallthru
      _
    // Predicated region
    $region26: #{dqn_forward.1} parent=1 // pred_check
      _
    $region27: #{dqn_forward.1} parent=1 // pred_check_branch
      %68 = sbr.rel (0) target = $region29
    $region28: #{dqn_forward.1} parent=1 // pred_region
      %69 = dma.done [#allocation6], 64
    $region29: #{dqn_forward.1} parent=1 // pred_fallthru
      _
    // Predicated region
    $region30: #{dqn_forward.1} parent=1 // pred_check
      _
    $region31: #{dqn_forward.1} parent=1 // pred_check_branch
      %71 = sbr.rel (0) target = $region33
    $region32: #{dqn_forward.1} parent=1 // pred_region
      %72 = dma.done [#allocation6], 512
    $region33: #{dqn_forward.1} parent=1 // pred_fallthru
      _
    // Predicated region
    $region34: #{dqn_forward.1} parent=1 // pred_check
      _
    $region35: #{dqn_forward.1} parent=1 // pred_check_branch
      %74 = sbr.rel (0) target = $region37
    $region36: #{dqn_forward.1} parent=1 // pred_region
      %75 = dma.done [#allocation9], 512
    $region37: #{dqn_forward.1} parent=1 // pred_fallthru
      _
    %v77 = vld [vmem:[#allocation2] sm:$0xff]
    %v78 = vld [vmem:[#allocation2 + $0x8] sm:$0xff]
    %v79 = vpack.c.bf16 %v78, %v77
    %v80 = vld [vmem:[%s4] sm:$0x7]
    %v81 = vld [vmem:[#allocation5] sm:$0xf]
    %v82 = vlaneseq
    %v83 = vshrl.u32 %v82, 7
    %v84 = vsub.s32 0, %v83
    %v85 = vrot.slane %v80, %v84
    %vm86 = vcmask 64512
    %v88 = vsel %vm86, %v79, 0
    %vm90 = vcmask 1043456
    %v92 = vsel %vm90, %v81, 0
    %94 = vmatprep.subr.bf16.mxu0 0
    %95 = vmatpush1.bf16.msra.mxu0 0
    %96 = vmatprep.subr.bf16.mxu0 0
    %97 = vmatpush1.bf16.msra.mxu0 0
    %98 = vmatprep.subr.bf16.mxu0 0
    %99 = vmatpush1.bf16.msra.mxu0 0
    %100 = vmatprep.subr.bf16.mxu0 0
    %101 = vmatpush1.bf16.msra.mxu0 0
    %102 = vmatprep.subr.bf16.mxu0 0
    %103 = vmatpush1.bf16.msra.mxu0 0
    %104 = vmatprep.subr.bf16.mxu0 0
    %105 = vmatpush1.bf16.msra.mxu0 0
    %106 = vmatprep.subr.bf16.mxu0 0
    %107 = vmatpush1.bf16.msra.mxu0 0
    %108 = vmatprep.subr.bf16.mxu0 0
    %109 = vmatpush1.bf16.msra.mxu0 %v92
    %110 = vmatprep.subr.bf16.mxu0 0
    %111 = vmatpush2.bf16.msra.mxu0 0
    %112 = vmatprep.subr.bf16.mxu0 0
    %113 = vmatpush2.bf16.msra.mxu0 0
    %114 = vmatprep.subr.bf16.mxu0 0
    %115 = vmatpush2.bf16.msra.mxu0 0
    %116 = vmatprep.subr.bf16.mxu0 0
    %117 = vmatpush2.bf16.msra.mxu0 0
    %118 = vmatprep.subr.bf16.mxu0 0
    %119 = vmatpush2.bf16.msra.mxu0 0
    %120 = vmatprep.subr.bf16.mxu0 0
    %121 = vmatpush2.bf16.msra.mxu0 0
    %122 = vmatprep.subr.bf16.mxu0 0
    %123 = vmatpush2.bf16.msra.mxu0 0
    %124 = vmatprep.subr.bf16.mxu0 0
    %125 = vmatpush2.bf16.msra.mxu0 0
    %126 = vmatprep.mubr.bf16.mxu0 0
    %127 = vmatmul.mubr.bf16.gmra.mxu0 %v88
    %v128 = vpop.f32.mrf.mxu0
    %v129 = vadd.f32 %v85, %v128
    %v130 = vpop.f32.mrf.mxu0
    %v131 = vpop.f32.mrf.mxu0
    %v132 = vadd.f32 %v85, %v131
    %v133 = vpop.f32.mrf.mxu0
    %134 = vdwg.mxu0
    %v135 = vmax.f32 %v129, 0.0
    %v136 = vmax.f32 %v132, 0.0
    %v137 = vpack.c.bf16 %v136, %v135
    %v138 = vld [vmem:[#allocation7] sm:$0xf]
    %v139 = vld [vmem:[#allocation7 + $0x4] sm:$0xf]
    %v140 = vld [vmem:[#allocation7 + $0x8] sm:$0xf]
    %v141 = vld [vmem:[#allocation7 + $0xc] sm:$0xf]
    %v142 = vld [vmem:[#allocation7 + $0x10] sm:$0xf]
    %v143 = vld [vmem:[#allocation7 + $0x14] sm:$0xf]
    %v144 = vld [vmem:[#allocation7 + $0x18] sm:$0xf]
    %v145 = vld [vmem:[#allocation7 + $0x1c] sm:$0xf]
    %v146 = vlaneseq
    %v147 = vshrl.u32 %v146, 7
    %v148 = vsub.s32 1, %v147
    %v149 = vrot.slane %v80, %v148
    %v158 = vunpack.c.l.b16 %v138
    %v159 = vunpack.c.l.b16 %v139
    %v160 = vunpack.c.l.b16 %v140
    %v161 = vunpack.c.l.b16 %v141
    %v162 = vunpack.c.l.b16 %v142
    %v163 = vunpack.c.l.b16 %v143
    %v164 = vunpack.c.l.b16 %v144
    %v165 = vunpack.c.l.b16 %v145
    %v166 = vpack.c.b16 %v159, %v158
    %v167 = vpack.c.b16 %v161, %v160
    %v168 = vpack.c.b16 %v163, %v162
    %v169 = vpack.c.b16 %v165, %v164
    %vm174 = vcmask 523264
    %v176 = vsel %vm174, %v137, 0
    %178 = vmatprep.subr.bf16.mxu0 0
    %179 = vmatpush1.bf16.msra.mxu0 0
    %180 = vmatprep.subr.bf16.mxu0 0
    %181 = vmatpush1.bf16.msra.mxu0 0
    %182 = vmatprep.subr.bf16.mxu0 0
    %183 = vmatpush1.bf16.msra.mxu0 0
    %184 = vmatprep.subr.bf16.mxu0 0
    %185 = vmatpush1.bf16.msra.mxu0 0
    %186 = vmatprep.subr.bf16.mxu0 0
    %187 = vmatpush1.bf16.msra.mxu0 %v169
    %188 = vmatprep.subr.bf16.mxu0 0
    %189 = vmatpush1.bf16.msra.mxu0 %v168
    %190 = vmatprep.subr.bf16.mxu0 0
    %191 = vmatpush1.bf16.msra.mxu0 %v167
    %192 = vmatprep.subr.bf16.mxu0 0
    %193 = vmatpush1.bf16.msra.mxu0 %v166
    %194 = vmatprep.subr.bf16.mxu0 0
    %195 = vmatpush2.bf16.msra.mxu0 0
    %196 = vmatprep.subr.bf16.mxu0 0
    %197 = vmatpush2.bf16.msra.mxu0 0
    %198 = vmatprep.subr.bf16.mxu0 0
    %199 = vmatpush2.bf16.msra.mxu0 0
    %200 = vmatprep.subr.bf16.mxu0 0
    %201 = vmatpush2.bf16.msra.mxu0 0
    %202 = vmatprep.subr.bf16.mxu0 0
    %203 = vmatpush2.bf16.msra.mxu0 0
    %204 = vmatprep.subr.bf16.mxu0 0
    %205 = vmatpush2.bf16.msra.mxu0 0
    %206 = vmatprep.subr.bf16.mxu0 0
    %207 = vmatpush2.bf16.msra.mxu0 0
    %208 = vmatprep.subr.bf16.mxu0 0
    %209 = vmatpush2.bf16.msra.mxu0 0
    %210 = vmatprep.mubr.bf16.mxu0 0
    %211 = vmatmul.mubr.bf16.gmra.mxu0 %v176
    %v212 = vpop.f32.mrf.mxu0
    %v213 = vadd.f32 %v149, %v212
    %v214 = vpop.f32.mrf.mxu0
    %v215 = vpop.f32.mrf.mxu0
    %v216 = vadd.f32 %v149, %v215
    %v217 = vpop.f32.mrf.mxu0
    %218 = vdwg.mxu0
    %v219 = vmax.f32 %v213, 0.0
    %v220 = vmax.f32 %v216, 0.0
    %v221 = vpack.c.bf16 %v220, %v219
    %v222 = vld [vmem:[#allocation8] sm:$0xf]
    %v223 = vld [vmem:[#allocation8 + $0x4] sm:$0xf]
    %v224 = vld [vmem:[#allocation8 + $0x8] sm:$0xf]
    %v225 = vld [vmem:[#allocation8 + $0xc] sm:$0xf]
    %v226 = vld [vmem:[#allocation8 + $0x10] sm:$0xf]
    %v227 = vld [vmem:[#allocation8 + $0x14] sm:$0xf]
    %v228 = vld [vmem:[#allocation8 + $0x18] sm:$0xf]
    %v229 = vld [vmem:[#allocation8 + $0x1c] sm:$0xf]
    %v230 = vlaneseq
    %v231 = vshrl.u32 %v230, 7
    %v232 = vsub.s32 2, %v231
    %v233 = vrot.slane %v80, %v232
    %v242 = vunpack.c.l.b16 %v222
    %v243 = vunpack.c.l.b16 %v223
    %v244 = vunpack.c.l.b16 %v224
    %v245 = vunpack.c.l.b16 %v225
    %v246 = vunpack.c.l.b16 %v226
    %v247 = vunpack.c.l.b16 %v227
    %v248 = vunpack.c.l.b16 %v228
    %v249 = vunpack.c.l.b16 %v229
    %v250 = vpack.c.b16 %v243, %v242
    %v251 = vpack.c.b16 %v245, %v244
    %v252 = vpack.c.b16 %v247, %v246
    %v253 = vpack.c.b16 %v249, %v248
    %v259 = vsel %vm174, %v221, 0
    %261 = vmatprep.subr.bf16.mxu0 0
    %262 = vmatpush1.bf16.msra.mxu0 0
    %263 = vmatprep.subr.bf16.mxu0 0
    %264 = vmatpush1.bf16.msra.mxu0 0
    %265 = vmatprep.subr.bf16.mxu0 0
    %266 = vmatpush1.bf16.msra.mxu0 0
    %267 = vmatprep.subr.bf16.mxu0 0
    %268 = vmatpush1.bf16.msra.mxu0 0
    %269 = vmatprep.subr.bf16.mxu0 0
    %270 = vmatpush1.bf16.msra.mxu0 %v253
    %271 = vmatprep.subr.bf16.mxu0 0
    %272 = vmatpush1.bf16.msra.mxu0 %v252
    %273 = vmatprep.subr.bf16.mxu0 0
    %274 = vmatpush1.bf16.msra.mxu0 %v251
    %275 = vmatprep.subr.bf16.mxu0 0
    %276 = vmatpush1.bf16.msra.mxu0 %v250
    %277 = vmatprep.subr.bf16.mxu0 0
    %278 = vmatpush2.bf16.msra.mxu0 0
    %279 = vmatprep.subr.bf16.mxu0 0
    %280 = vmatpush2.bf16.msra.mxu0 0
    %281 = vmatprep.subr.bf16.mxu0 0
    %282 = vmatpush2.bf16.msra.mxu0 0
    %283 = vmatprep.subr.bf16.mxu0 0
    %284 = vmatpush2.bf16.msra.mxu0 0
    %285 = vmatprep.subr.bf16.mxu0 0
    %286 = vmatpush2.bf16.msra.mxu0 0
    %287 = vmatprep.subr.bf16.mxu0 0
    %288 = vmatpush2.bf16.msra.mxu0 0
    %289 = vmatprep.subr.bf16.mxu0 0
    %290 = vmatpush2.bf16.msra.mxu0 0
    %291 = vmatprep.subr.bf16.mxu0 0
    %292 = vmatpush2.bf16.msra.mxu0 0
    %293 = vmatprep.mubr.bf16.mxu0 0
    %294 = vmatmul.mubr.bf16.gmra.mxu0 %v259
    %v295 = vpop.f32.mrf.mxu0
    %v296 = vadd.f32 %v233, %v295
    %v297 = vpop.f32.mrf.mxu0
    %v298 = vpop.f32.mrf.mxu0
    %v299 = vadd.f32 %v233, %v298
    %v300 = vpop.f32.mrf.mxu0
    %301 = vdwg.mxu0
    %vm302 = vcmask 31744
    %303 = vst.msk [vmem:[#allocation10] sm:$0xff] %vm302, %v296
    %304 = vst.msk [vmem:[#allocation10 + $0x8] sm:$0xff] %vm302, %v299
    %v305 = vlaneseq
    %v306 = vand.u32 %v305, 127
    %vm307 = vcmp.lt.s32.totalorder %v306, 4
    %v308 = vsel %vm307, %v296, -inf
    %v309 = vsel %vm307, %v299, -inf
    %310 = vmax.xlane.f32.xlu0 %v308
    %v311 = vpop.xlane.xlu0 %310
    %312 = vmax.xlane.f32.xlu0 %v309
    %v313 = vpop.xlane.xlu0 %312
    %vm314 = vcmp.eq.f32.partialorder %v308, %v311
    %vm315 = vcmp.eq.f32.partialorder %v309, %v313
    %vm316 = vmand %vm314, %vm307
    %vm317 = vmand %vm315, %vm307
    %v318 = vsel %vm316, %v306, 128
    %v319 = vsel %vm317, %v306, 128
    %v320 = vand.u32 %v318, 65535
    %v321 = vshra.s32 %v318, 16
    %v322 = vcvt.s32.f32 %v320
    %v323 = vcvt.s32.f32 %v321
    %324 = vmin.xlane.f32.xlu0 %v323
    %v325 = vpop.xlane.xlu0 %324
    %vm326 = vcmp.eq.f32.partialorder %v323, %v325
    %v327 = vsel %vm326, %v322, inf
    %328 = vmin.xlane.f32.xlu0 %v327
    %v329 = vpop.xlane.xlu0 %328
    %v330 = vcvt.f32.s32 %v329
    %v331 = vcvt.f32.s32 %v325
    %v332 = vshll.u32 %v331, 16
    %v333 = vadd.s32 %v332, %v330
    %v334 = vand.u32 %v319, 65535
    %v335 = vshra.s32 %v319, 16
    %v336 = vcvt.s32.f32 %v334
    %v337 = vcvt.s32.f32 %v335
    %338 = vmin.xlane.f32.xlu0 %v337
    %v339 = vpop.xlane.xlu0 %338
    %vm340 = vcmp.eq.f32.partialorder %v337, %v339
    %v341 = vsel %vm340, %v336, inf
    %342 = vmin.xlane.f32.xlu0 %v341
    %v343 = vpop.xlane.xlu0 %342
    %v344 = vcvt.f32.s32 %v343
    %v345 = vcvt.f32.s32 %v339
    %v346 = vshll.u32 %v345, 16
    %v347 = vadd.s32 %v346, %v344
    %vm348 = vcmask 7168
    %349 = vst.msk [vmem:[#allocation11] sm:$0xff] %vm348, %v333
    %350 = vst.msk [vmem:[#allocation11 + $0x8] sm:$0xff] %vm348, %v347
    // Predicated region
    $region38: #{dqn_forward.1} parent=1 // pred_check
      _
    $region39: #{dqn_forward.1} parent=1 // pred_check_branch
      %352 = sbr.rel (0) target = $region41
    $region40: #{dqn_forward.1} parent=1 // pred_region
      %s354 = ssub.s32 256, 32
      %355 = vsyncadd [#allocation4], %s354
      %s356 = sshll.u32 [#allocation10], 4
      %s357 = int_to_ptr.vmem [resolvable:$true] %s356
      %362 = dma.vmem_to_hbm [thread:$0]  %s357, 32, %s5, [#allocation4], 32, 32, 2
    $region41: #{dqn_forward.1} parent=1 // pred_fallthru
      _
    // Predicated region
    $region42: #{dqn_forward.1} parent=1 // pred_check
      _
    $region43: #{dqn_forward.1} parent=1 // pred_check_branch
      %364 = sbr.rel (0) target = $region45
    $region44: #{dqn_forward.1} parent=1 // pred_region
      // Predicated region
      $region46: #{dqn_forward.1} parent=44 // pred_check
        _
      $region47: #{dqn_forward.1} parent=44 // pred_check_branch
        %366 = sbr.rel (0) target = $region49
      $region48: #{dqn_forward.1} parent=44 // pred_region
        // Predicated region
        $region50: #{dqn_forward.1} parent=48 // pred_check
          _
        $region51: #{dqn_forward.1} parent=48 // pred_check_branch
          %368 = sbr.rel target = $region53
        $region52: #{dqn_forward.1} parent=48 // pred_region
          // Predicated region
          $region65: #{dqn_forward.1} parent=52 // pred_check
            _
          $region66: #{dqn_forward.1} parent=52 // pred_check_branch
            %384 = sbr.rel (0) target = $region68
          $region67: #{dqn_forward.1} parent=52 // pred_region
            %s386 = ssub.s32 4, 1
            loop: start=0, step=1, limit=1
            $region69: #{dqn_forward.1} parent=67 // loop_pre_header
              _
            $region70: #{dqn_forward.1} parent=67 // loop_header
              %s388 = sphi 0, %s392
              %p389 = scmp.ge.s32.totalorder %s388, 1
              %s393 = sphi [#allocation11], [#allocation11]
              %s394 = sphi %s6, %s6
            $region71: #{dqn_forward.1} parent=67 // loop_header_branch
              %391 = sbr.rel (%p389) target = $region75
            $region72: #{dqn_forward.1} parent=67 // loop_body
              %v395 = vld [vmem:[%s393] sm:%s386]
              %396 = vst [vmem:[%s394] sm:%s386] %v395
            $region73: #{dqn_forward.1} parent=67 // loop_footer
              %s392 = sadd.s32 1, %s388
            $region74: #{dqn_forward.1} parent=67 // loop_footer_branch
              %387 = sbr.rel target = $region70
            $region75: #{dqn_forward.1} parent=67 // loop_exit
              _
          $region68: #{dqn_forward.1} parent=52 // pred_fallthru
            _
        $region53: #{dqn_forward.1} parent=48 // pred_fallthru
          _
        // Predicated region
        $region54: #{dqn_forward.1} parent=48 // pred_check
          _
        $region55: #{dqn_forward.1} parent=48 // pred_check_branch
          %370 = sbr.rel (0) target = $region57
        $region56: #{dqn_forward.1} parent=48 // pred_region
          %s372 = ssub.s32 4, 1
          loop: start=0, step=1, limit=1
          $region58: #{dqn_forward.1} parent=56 // loop_pre_header
            _
          $region59: #{dqn_forward.1} parent=56 // loop_header
            %s374 = sphi 0, %s378
            %p375 = scmp.ge.s32.totalorder %s374, 1
            %s379 = sphi [#allocation11], [#allocation11]
            %s380 = sphi %s6, %s6
          $region60: #{dqn_forward.1} parent=56 // loop_header_branch
            %377 = sbr.rel (%p375) target = $region64
          $region61: #{dqn_forward.1} parent=56 // loop_body
            %v381 = vld [vmem:[%s379] sm:%s372]
            %382 = vst [vmem:[%s380] sm:%s372] %v381
          $region62: #{dqn_forward.1} parent=56 // loop_footer
            %s378 = sadd.s32 1, %s374
          $region63: #{dqn_forward.1} parent=56 // loop_footer_branch
            %373 = sbr.rel target = $region59
          $region64: #{dqn_forward.1} parent=56 // loop_exit
            _
        $region57: #{dqn_forward.1} parent=48 // pred_fallthru
          _
      $region49: #{dqn_forward.1} parent=44 // pred_fallthru
        _
      %397 = vnop
    $region45: #{dqn_forward.1} parent=1 // pred_fallthru
      _
    // Predicated region
    $region76: #{dqn_forward.1} parent=1 // pred_check
      _
    $region77: #{dqn_forward.1} parent=1 // pred_check_branch
      %399 = sbr.rel (0) target = $region79
    $region78: #{dqn_forward.1} parent=1 // pred_region
      %400 = dma.done [#allocation4], 256
    $region79: #{dqn_forward.1} parent=1 // pred_fallthru
      _
    // Predicated region
    $region80: #{dqn_forward.1} parent=1 // pred_check
      _
    $region81: #{dqn_forward.1} parent=1 // pred_check_branch
      %402 = sbr.rel (0) target = $region83
    $region82: #{dqn_forward.1} parent=1 // pred_region
      _
    $region83: #{dqn_forward.1} parent=1 // pred_fallthru
      _
    %403 = vsyncpa [#allocation3], 1
    %404 = vsyncpa [#allocation6], 1
    %405 = vsyncpa [#allocation9], 1
    %406 = vsyncpa [#allocation4], 1

</llo_original>
